<compile_context>
chip_gen: v5e
topology: v5e:2x2
jax: 0.10.0
libtpu: 0.0.40
codegen_flags: <defaults>
</compile_context>

<pallas_src>
import functools

import jax
import jax.numpy as jnp
from jax.experimental import pallas as pl
from jax.experimental.pallas import tpu as pltpu


def _merge_kernel(w_ref, p_ref, shift_ref, o_ref):
    # w_ref:     (Cout, kdim)  conv weight with the BN scale already folded in
    # p_ref:     (kdim, TM)    space-to-depth patches: one batch, TM spatial cols
    # shift_ref: (Cout, 1)     folded BN shift  (beta - mean * scale)
    # o_ref:     (Cout, TM)    lane-dense output tile (M on the 128-lane axis)
    acc = jnp.dot(w_ref[...], p_ref[...], preferred_element_type=jnp.float32)
    o_ref[...] = (acc + shift_ref[...]).astype(o_ref.dtype)


def _ceil_to(a, b):
    return -(-a // b) * b


def _im2col_t(x, k, stride):
    """x: [N, C, H, W] -> patches_T [N, C*K*K, Ho*Wo] with (c, kh, kw) ordering
    along the kdim axis (matches PyTorch OIHW weight flatten)."""
    n, c, h, w = x.shape
    ho = (h - k) // stride + 1
    wo = (w - k) // stride + 1
    if k == stride and h % k == 0 and w % k == 0:
        # Non-overlapping patches: pure space-to-depth (reshape + transpose).
        xr = x.reshape(n, c, ho, k, wo, k)
        xr = jnp.transpose(xr, (0, 1, 3, 5, 2, 4))        # (n, c, kh, kw, ho, wo)
        return xr.reshape(n, c * k * k, ho * wo), ho, wo
    # General fallback: one strided slice per kernel tap.
    cols = []
    for kh in range(k):
        for kw in range(k):
            sl = jax.lax.slice(
                x,
                (0, 0, kh, kw),
                (n, c, kh + (ho - 1) * stride + 1, kw + (wo - 1) * stride + 1),
                (1, 1, stride, stride),
            )
            cols.append(sl.reshape(n, c, ho * wo))
    patches = jnp.stack(cols, axis=2)                     # (n, c, K*K, m)
    return patches.reshape(n, c * k * k, ho * wo), ho, wo


def _pick_m_tile(m, kdim, cout, in_itemsize, out_itemsize):
    """Largest lane-aligned M tile fitting a conservative double-buffered VMEM
    budget (safe for v7x's 32 MiB default scoped VMEM; v5e/v6e have headroom)."""
    m128 = _ceil_to(max(m, 1), 128)
    budget = 16 * 1024 * 1024
    tm = 128
    for cand in (2048, 1024, 512, 256):
        if cand > m128:
            continue
        need = 2 * cand * (kdim * in_itemsize + cout * out_itemsize) \
               + kdim * cout * in_itemsize + cout * 4
        if need <= budget:
            tm = cand
            break
    return min(tm, m128)


def patch_merging_forward(x, weight, gamma, beta, run_mean, run_var,
                          ksize, stride, eps=1e-5, compute_dtype=None):
    """x: [N, Cin, H, W] (NCHW).  weight: [Cout, Cin, K, K].  Returns NCHW.

    compute_dtype: dtype of the matmul input streams (e.g. jnp.bfloat16 halves
    the patch DMA traffic on v6e/v7x).  Defaults to x.dtype.  The BN fold and
    the accumulator/epilogue stay in float32.
    """
    n, cin, h, w = x.shape
    cout = weight.shape[0]
    kdim = cin * ksize * ksize

    patches_t, ho, wo = _im2col_t(x, ksize, stride)       # [N, kdim, M]
    m = ho * wo

    # Fold eval-mode BatchNorm2d into the weight (scale) and a per-channel shift.
    scale = gamma.astype(jnp.float32) / jnp.sqrt(run_var.astype(jnp.float32) + eps)
    w_mat = weight.reshape(cout, kdim).astype(jnp.float32)
    w_scaled = w_mat * scale[:, None]                     # [Cout, kdim], f32 fold
    shift = (beta.astype(jnp.float32)
             - run_mean.astype(jnp.float32) * scale).reshape(cout, 1)

    if compute_dtype is None:
        compute_dtype = x.dtype
    compute_dtype = jnp.dtype(compute_dtype)
    patches_t = patches_t.astype(compute_dtype)
    w_scaled = w_scaled.astype(compute_dtype)

    out_dtype = x.dtype
    tm = _pick_m_tile(m, kdim, cout,
                      compute_dtype.itemsize, jnp.dtype(out_dtype).itemsize)
    m_pad = _ceil_to(m, tm)
    if m_pad != m:
        patches_t = jnp.pad(patches_t, ((0, 0), (0, 0), (0, m_pad - m)))

    flops = 2 * n * m_pad * kdim * cout
    bytes_accessed = (n * kdim * m_pad * compute_dtype.itemsize        # patches
                      + cout * kdim * compute_dtype.itemsize           # weight
                      + cout * 4                                       # shift
                      + n * cout * m_pad * jnp.dtype(out_dtype).itemsize)  # out

    out = pl.pallas_call(
        _merge_kernel,
        out_shape=jax.ShapeDtypeStruct((n, cout, m_pad), out_dtype),
        grid_spec=pltpu.PrefetchScalarGridSpec(
            num_scalar_prefetch=0,
            grid=(n, m_pad // tm),
            in_specs=[
                pl.BlockSpec((cout, kdim), lambda b, i: (0, 0)),        # weight (resident)
                pl.BlockSpec((None, kdim, tm), lambda b, i: (b, 0, i)),  # patches tile
                pl.BlockSpec((cout, 1), lambda b, i: (0, 0)),           # BN shift (resident)
            ],
            out_specs=pl.BlockSpec((None, cout, tm), lambda b, i: (b, 0, i)),
        ),
        compiler_params=pltpu.CompilerParams(
            dimension_semantics=("parallel", "parallel")),
        cost_estimate=pl.CostEstimate(
            flops=flops, transcendentals=0, bytes_accessed=bytes_accessed),
    )(w_scaled, patches_t, shift)

    # [N, Cout, M] is already NCHW-ordered; just drop padding and reshape.
    out = out[:, :, :m].reshape(n, cout, ho, wo)
    return out


def _reference(x, weight, gamma, beta, run_mean, run_var, stride, eps=1e-5):
    y = jax.lax.conv_general_dilated(
        x, weight, window_strides=(stride, stride), padding="VALID",
        dimension_numbers=("NCHW", "OIHW", "NCHW"))
    scale = (gamma / jnp.sqrt(run_var + eps)).reshape(1, -1, 1, 1)
    shift = (beta - run_mean * (gamma / jnp.sqrt(run_var + eps))).reshape(1, -1, 1, 1)
    return y * scale + shift


if __name__ == "__main__":
    # Module config: PatchMerging(patch_size2=2, patch_stride2=2, dim=4, norm_layer=BatchNorm2d)
    patch_size2 = 2
    patch_stride2 = 2
    dim = 4
    cout = 2 * dim

    key = jax.random.PRNGKey(0)
    k_x, k_w, k_g, k_b, k_m, k_v = jax.random.split(key, 6)

    # Input: batch=2, channels=dim=4, spatial=16x16 (NCHW, like PyTorch)
    x = jax.random.normal(k_x, (2, dim, 16, 16), dtype=jnp.float32)

    # Conv2d weight [2*dim, dim, K, K], no bias (deterministic init)
    weight = jax.random.normal(k_w, (cout, dim, patch_size2, patch_size2),
                               dtype=jnp.float32) * 0.1
    # BatchNorm2d(2*dim) parameters / running stats (eval mode)
    gamma = 1.0 + 0.1 * jax.random.normal(k_g, (cout,), dtype=jnp.float32)
    beta = 0.1 * jax.random.normal(k_b, (cout,), dtype=jnp.float32)
    run_mean = 0.05 * jax.random.normal(k_m, (cout,), dtype=jnp.float32)
    run_var = jnp.abs(1.0 + 0.1 * jax.random.normal(k_v, (cout,), dtype=jnp.float32))

    fwd = jax.jit(functools.partial(
        patch_merging_forward, ksize=patch_size2, stride=patch_stride2))
    out = fwd(x, weight, gamma, beta, run_mean, run_var)
    out = jax.block_until_ready(out)

    ref = _reference(x, weight, gamma, beta, run_mean, run_var, patch_stride2)
    assert out.shape == (2, cout, 8, 8), out.shape
    assert jnp.allclose(out, ref, atol=1e-4, rtol=1e-4), \
        float(jnp.max(jnp.abs(out - ref)))
    print("KERNEL_OK")
</pallas_src>

<mosaic_0001>
module attributes {stable_mosaic.version = 11 : i64} {
  func.func @_merge_kernel(%arg0: i32, %arg1: i32, %arg2: memref<8x16xf32, #tpu.memory_space<vmem>>, %arg3: memref<1x16x128xf32, #tpu.memory_space<vmem>>, %arg4: memref<8x1xf32, #tpu.memory_space<vmem>>, %arg5: memref<1x8x128xf32, #tpu.memory_space<vmem>>) attributes {dimension_semantics = [#tpu.dimension_semantics<parallel>, #tpu.dimension_semantics<parallel>], iteration_bounds = array<i64: 2, 1>, scalar_prefetch = 0 : i64, scratch_operands = 0 : i64, tpu.core_type = #tpu.core_type<tc>, window_params = [{pipeline_mode = #tpu.pipeline_mode<synchronous>, transform_indices = @transform_0, window_bounds = array<i64: 8, 16>}, {transform_indices = @transform_1, window_bounds = array<i64: 1, 16, 128>}, {pipeline_mode = #tpu.pipeline_mode<synchronous>, transform_indices = @transform_2, window_bounds = array<i64: 8, 1>}, {transform_indices = @transform_3, window_bounds = array<i64: 1, 8, 128>}]} {
    %c0 = arith.constant 0 : index
    %c0_0 = arith.constant 0 : index
    %0 = vector.load %arg2[%c0, %c0_0] : memref<8x16xf32, #tpu.memory_space<vmem>>, vector<8x16xf32>
    %c0_1 = arith.constant 0 : index
    %c0_2 = arith.constant 0 : index
    %c0_3 = arith.constant 0 : index
    %1 = vector.load %arg3[%c0_1, %c0_2, %c0_3] : memref<1x16x128xf32, #tpu.memory_space<vmem>>, vector<1x16x128xf32>
    %2 = vector.shape_cast %1 : vector<1x16x128xf32> to vector<16x128xf32>
    %cst = arith.constant dense<0.000000e+00> : vector<8x128xf32>
    %3 = tpu.matmul %0, %2, %cst {dimension_numbers = #tpu.dot_dimension_numbers<[1], [0], [0], [1], [0, 0, 1, 1], [], []>} : vector<8x16xf32>, vector<16x128xf32>, vector<8x128xf32> -> vector<8x128xf32>
    %c0_4 = arith.constant 0 : index
    %c0_5 = arith.constant 0 : index
    %4 = vector.load %arg4[%c0_4, %c0_5] : memref<8x1xf32, #tpu.memory_space<vmem>>, vector<8x1xf32>
    %5 = vector.broadcast %4 : vector<8x1xf32> to vector<8x128xf32>
    %6 = arith.addf %3, %5 : vector<8x128xf32>
    %c0_6 = arith.constant 0 : index
    %c0_7 = arith.constant 0 : index
    %c0_8 = arith.constant 0 : index
    %7 = vector.load %arg5[%c0_6, %c0_7, %c0_8] : memref<1x8x128xf32, #tpu.memory_space<vmem>>, vector<1x8x128xf32>
    %8 = vector.shape_cast %7 : vector<1x8x128xf32> to vector<8x128xf32>
    %9 = vector.shape_cast %6 : vector<8x128xf32> to vector<1x8x128xf32>
    tpu.vector_store %arg5[%c0_6, %c0_7, %c0_8], %9 {strides = array<i32>} : memref<1x8x128xf32, #tpu.memory_space<vmem>>, vector<1x8x128xf32>,
    return
  }
  func.func @transform_0(%arg0: i32, %arg1: i32) -> (i32, i32) {
    %c0_i32 = arith.constant 0 : i32
    %c0_i32_0 = arith.constant 0 : i32
    %c0_i32_1 = arith.constant 0 : i32
    return %c0_i32, %c0_i32_0 : i32, i32
  }
  func.func @transform_1(%arg0: i32, %arg1: i32) -> (i32, i32, i32) {
    %c0_i32 = arith.constant 0 : i32
    %c0_i32_0 = arith.constant 0 : i32
    return %arg0, %c0_i32, %arg1 : i32, i32, i32
  }
  func.func @transform_2(%arg0: i32, %arg1: i32) -> (i32, i32) {
    %c0_i32 = arith.constant 0 : i32
    %c0_i32_0 = arith.constant 0 : i32
    %c0_i32_1 = arith.constant 0 : i32
    return %c0_i32, %c0_i32_0 : i32, i32
  }
  func.func @transform_3(%arg0: i32, %arg1: i32) -> (i32, i32, i32) {
    %c0_i32 = arith.constant 0 : i32
    %c0_i32_0 = arith.constant 0 : i32
    return %arg0, %c0_i32, %arg1 : i32, i32, i32
  }
}

</mosaic_0001>

<llo_original>
// kernel: patch_merging_forward.1
$region0: #{patch_merging_forward.1}
  #allocation0 [shape = 'u32[]', space=smem, size = 0x4, offset = 0x4, fixed_abs, tag = 'smem constant byte address 0x4 - core index']
  #allocation1 [shape = 'u32[72,128]{1,0:T(1,128)}', space=vmem, size = 0x9000, scoped, tag = 'internal scratch']
  %s0 = inlined_call_operand.vmem [shape: f32[8,16], index: 0, kind: input, shape index: {}]
  %s1 = inlined_call_operand.vmem [shape: f32[2,16,128], index: 1, kind: input, shape index: {}]
  %s2 = inlined_call_operand.vmem [shape: f32[8,1], index: 2, kind: input, shape index: {}]
  %s3 = inlined_call_operand.vmem [shape: f32[2,8,128], index: 3, kind: output, shape index: {}]
  %s4 = sld [smem:[#allocation0]]
  $region45: #{patch_merging_forward.1} parent=0
    _
  %s6 = ssub.s32 1, %s4
  %s7 = scalar_select 0, %s6, %s4
  loop: start=0, step=1, limit=4
  $region2: #{patch_merging_forward.1} parent=0 // loop_pre_header
    _
  $region3: #{patch_merging_forward.1} parent=0 // loop_header
    %s9 = sphi 0, %s13
    %p10 = scmp.ge.s32.totalorder %s9, 4
    %s16 = sphi 0, %s28
    %s17 = sphi 0, %s24
    %s18 = sphi 0, %s16
    %s19 = sphi 0, %s17
    %s20 = sphi 0, %s18
    %s21 = sphi 0, %s19
    %s29 = sphi 0, %s29
    %s31 = sphi 0, %s29
    %s32 = sphi 0, %s31
    %s46 = sphi 0, %s32
    %s54 = sphi 0, %s56
    %s57 = sphi 0, %s54
    %s58 = sphi 0, %s57
    %s74 = sphi 0, %s58
    %s78 = sphi 0, %s78
    %s80 = sphi 0, %s78
    %s81 = sphi 0, %s80
    %s95 = sphi 0, %s81
    %s103 = sphi 0, %s105
    %s106 = sphi 0, %s103
    %s107 = sphi 0, %s106
    %s123 = sphi 0, %s107
  $region4: #{patch_merging_forward.1} parent=0 // loop_header_branch
    %12 = sbr.rel (%p10) target = $region8
  $region5: #{patch_merging_forward.1} parent=0 // loop_body
    %s14 = ssub.s32 %s9, 1
    %s15 = ssub.s32 %s9, 2
    %s22 = sadd.s32 1, %s17
    %p23 = scmp.ge.s32.totalorder %s22, 1
    %s24 = scalar_select %p23, 0, %s22
    %s25 = sadd.s32 1, %s16
    %s26 = scalar_select %p23, %s25, %s16
    %p27 = scmp.ge.s32.totalorder %s26, 2
    %s28 = scalar_select %p27, 0, %s26
    %s30 = sadd.s32 %s29, 1
    %p33 = scmp.eq.s32.totalorder %s9, 1
    %p34 = scmp.ne.s32.totalorder %s29, %s31
    %p35 = scmp.eq.s32.totalorder %s9, 0
    %p36 = por %p34, %p35
    %p37 = scmp.ne.s32.totalorder %s29, %s31
    %p38 = scmp.eq.s32.totalorder %s14, 1
    %p39 = por %p37, %p38
    %p40 = scmp.ne.s32.totalorder %s31, %s32
    %p41 = scmp.eq.s32.totalorder %s14, 0
    %p42 = por %p40, %p41
    %p43 = scmp.ne.s32.totalorder %s31, %s32
    %p44 = scmp.eq.s32.totalorder %s15, 1
    %p45 = por %p43, %p44
    %p47 = scmp.ne.s32.totalorder %s32, %s46
    %p48 = scmp.eq.s32.totalorder %s15, 0
    %p49 = por %p47, %p48
    %s50 = ssub.s32 %s16, %s28
    %s51 = ssub.s32 %s17, %s24
    %s52 = sor.u32 %s50, %s51
    %p53 = scmp.eq.s32.totalorder %s52, 0
    %s55 = sadd.s32 %s54, 1
    %s56 = scalar_select %p53, %s54, %s55
    %p59 = pneg %p53
    %p60 = scmp.eq.s32.totalorder %s9, 1
    %p61 = por %p59, %p60
    %p62 = scmp.ne.s32.totalorder %s54, %s57
    %p63 = scmp.eq.s32.totalorder %s9, 0
    %p64 = por %p62, %p63
    %p65 = scmp.ne.s32.totalorder %s54, %s57
    %p66 = scmp.eq.s32.totalorder %s14, 1
    %p67 = por %p65, %p66
    %p68 = scmp.ne.s32.totalorder %s57, %s58
    %p69 = scmp.eq.s32.totalorder %s14, 0
    %p70 = por %p68, %p69
    %p71 = scmp.ne.s32.totalorder %s57, %s58
    %p72 = scmp.eq.s32.totalorder %s15, 1
    %p73 = por %p71, %p72
    %p75 = scmp.ne.s32.totalorder %s58, %s74
    %p76 = scmp.eq.s32.totalorder %s15, 0
    %p77 = por %p75, %p76
    %s79 = sadd.s32 %s78, 1
    %p82 = scmp.eq.s32.totalorder %s9, 1
    %p83 = scmp.ne.s32.totalorder %s78, %s80
    %p84 = scmp.eq.s32.totalorder %s9, 0
    %p85 = por %p83, %p84
    %p86 = scmp.ne.s32.totalorder %s78, %s80
    %p87 = scmp.eq.s32.totalorder %s14, 1
    %p88 = por %p86, %p87
    %p89 = scmp.ne.s32.totalorder %s80, %s81
    %p90 = scmp.eq.s32.totalorder %s14, 0
    %p91 = por %p89, %p90
    %p92 = scmp.ne.s32.totalorder %s80, %s81
    %p93 = scmp.eq.s32.totalorder %s15, 1
    %p94 = por %p92, %p93
    %p96 = scmp.ne.s32.totalorder %s81, %s95
    %p97 = scmp.eq.s32.totalorder %s15, 0
    %p98 = por %p96, %p97
    %s99 = ssub.s32 %s16, %s28
    %s100 = ssub.s32 %s17, %s24
    %s101 = sor.u32 %s99, %s100
    %p102 = scmp.eq.s32.totalorder %s101, 0
    %s104 = sadd.s32 %s103, 1
    %s105 = scalar_select %p102, %s103, %s104
    %p108 = pneg %p102
    %p109 = scmp.eq.s32.totalorder %s9, 1
    %p110 = por %p108, %p109
    %p111 = scmp.ne.s32.totalorder %s103, %s106
    %p112 = scmp.eq.s32.totalorder %s9, 0
    %p113 = por %p111, %p112
    %p114 = scmp.ne.s32.totalorder %s103, %s106
    %p115 = scmp.eq.s32.totalorder %s14, 1
    %p116 = por %p114, %p115
    %p117 = scmp.ne.s32.totalorder %s106, %s107
    %p118 = scmp.eq.s32.totalorder %s14, 0
    %p119 = por %p117, %p118
    %p120 = scmp.ne.s32.totalorder %s106, %s107
    %p121 = scmp.eq.s32.totalorder %s15, 1
    %p122 = por %p120, %p121
    %p124 = scmp.ne.s32.totalorder %s107, %s123
    %p125 = scmp.eq.s32.totalorder %s15, 0
    %p126 = por %p124, %p125
    %p127 = scmp.le.s32.totalorder 1, %s9
    %p128 = scmp.lt.s32.totalorder %s9, 3
    %p129 = pnand %p127, %p128
    %p130 = pneg %p129
    // Predicated region
    $region9: #{patch_merging_forward.1} parent=5 // pred_check
      _
    $region10: #{patch_merging_forward.1} parent=5 // pred_check_branch
      %132 = sbr.rel (%p129) target = $region12
    $region11: #{patch_merging_forward.1} parent=5 // pred_region
      %s133 = ssub.s32 %s9, 1
      // Predicated region
      $region13: #{patch_merging_forward.1} parent=11 // pred_check
        %p134 = pneg %p42
      $region14: #{patch_merging_forward.1} parent=11 // pred_check_branch
        %136 = sbr.rel (%p134) target = $region16
      $region15: #{patch_merging_forward.1} parent=11 // pred_region
        _
      $region16: #{patch_merging_forward.1} parent=11 // pred_fallthru
        _
      // Predicated region
      $region17: #{patch_merging_forward.1} parent=11 // pred_check
        %p137 = pneg %p91
      $region18: #{patch_merging_forward.1} parent=11 // pred_check_branch
        %139 = sbr.rel (%p137) target = $region20
      $region19: #{patch_merging_forward.1} parent=11 // pred_region
        _
      $region20: #{patch_merging_forward.1} parent=11 // pred_fallthru
        _
    $region12: #{patch_merging_forward.1} parent=5 // pred_fallthru
      _
    %p140 = scmp.lt.s32.totalorder %s9, 2
    // Predicated region
    $region21: #{patch_merging_forward.1} parent=5 // pred_check
      %p141 = pneg %p140
    $region22: #{patch_merging_forward.1} parent=5 // pred_check_branch
      %143 = sbr.rel (%p141) target = $region24
    $region23: #{patch_merging_forward.1} parent=5 // pred_region
      // Predicated region
      $region25: #{patch_merging_forward.1} parent=23 // pred_check
        %p144 = pneg %p64
      $region26: #{patch_merging_forward.1} parent=23 // pred_check_branch
        %146 = sbr.rel (%p144) target = $region28
      $region27: #{patch_merging_forward.1} parent=23 // pred_region
        %p147 = scmp.lt.s32.totalorder %s16, 1
        %s148 = scalar_select %p147, %s16, 1
        %p149 = scmp.lt.s32.totalorder %s17, 0
        %s150 = scalar_select %p149, %s17, 0
        %s151 = smul.addr %s148, 2
        %s152 = sadd.s32 %s150, %s151
        %s153 = smul.addr %s152, 8
        %s154 = scalar_lea.vmem %s1, %s153
      $region28: #{patch_merging_forward.1} parent=23 // pred_fallthru
        _
    $region24: #{patch_merging_forward.1} parent=5 // pred_fallthru
      _
    %p155 = scmp.le.s32.totalorder 1, %s9
    %p156 = scmp.lt.s32.totalorder %s9, 3
    %p157 = pnand %p155, %p156
    %p158 = pneg %p157
    // Predicated region
    $region29: #{patch_merging_forward.1} parent=5 // pred_check
      _
    $region30: #{patch_merging_forward.1} parent=5 // pred_check_branch
      %160 = sbr.rel (%p157) target = $region32
    $region31: #{patch_merging_forward.1} parent=5 // pred_region
      %s161 = ssub.s32 %s9, 1
      %p162 = pneg %p42
      %p163 = pneg %p39
      %p164 = scmp.lt.s32.totalorder %s18, 1
      %s165 = scalar_select %p164, %s18, 1
      %p166 = scmp.lt.s32.totalorder %s19, 0
      %s167 = scalar_select %p166, %s19, 0
      %s168 = smul.addr %s165, 2
      %s169 = sadd.s32 %s167, %s168
      %s170 = smul.addr %s169, 8
      %s171 = scalar_lea.vmem %s1, %s170
      %p172 = pneg %p70
      %p173 = pneg %p67
      %p174 = pneg %p91
      %p175 = pneg %p88
      %p176 = pneg %p119
      %p177 = pneg %p116
      %p178 = scmp.lt.s32.totalorder %s18, 1
      %s179 = scalar_select %p178, %s18, 1
      %p180 = scmp.lt.s32.totalorder %s19, 0
      %s181 = scalar_select %p180, %s19, 0
      %s182 = sadd.s32 %s181, %s179
      %s183 = smul.addr %s182, 8
      %s184 = scalar_lea.vmem %s3, %s183
      %p185 = scmp.lt.s32.totalorder %s18, 1
      %s186 = scalar_select %p185, %s18, 1
      %p187 = scmp.lt.s32.totalorder %s19, 0
      %s188 = scalar_select %p187, %s19, 0
      %s189 = smul.addr %s186, 2
      %s190 = sadd.s32 %s188, %s189
      %s191 = smul.addr %s190, 8
      %s192 = scalar_lea.vmem %s1, %s191
      %p193 = scmp.lt.s32.totalorder %s18, 1
      %s194 = scalar_select %p193, %s18, 1
      %p195 = scmp.lt.s32.totalorder %s19, 0
      %s196 = scalar_select %p195, %s19, 0
      %s197 = sadd.s32 %s196, %s194
      %s198 = smul.addr %s197, 8
      %s199 = scalar_lea.vmem %s3, %s198
      %v200 = vld [vmem:[%s0] sm:$0xff]
      %v201 = vld [vmem:[%s192] sm:$0xff]
      %v202 = vld [vmem:[%s192 + $0x8] sm:$0xff]
      %v203 = vld [vmem:[%s2] sm:$0xff]
      %205 = vset.pattern.permute.xlu0 0
      %206 = vperm.xlu0 %205, %v203
      %v207 = vpop.permute.xlu0 %206
      %vm209 = vcmask 130048
      %v211 = vsel %vm209, %v200, 0
      %213 = vmatpush.msra.mxu0 0.0
      %214 = vmatpush.msra.mxu0 0.0
      %215 = vmatpush.msra.mxu0 0.0
      %216 = vmatpush.msra.mxu0 0.0
      %217 = vmatpush.msra.mxu0 0.0
      %218 = vmatpush.msra.mxu0 0.0
      %219 = vmatpush.msra.mxu0 0.0
      %220 = vmatpush.msra.mxu0 0.0
      %221 = vmatpush.msra.mxu0 0.0
      %222 = vmatpush.msra.mxu0 0.0
      %223 = vmatpush.msra.mxu0 0.0
      %224 = vmatpush.msra.mxu0 0.0
      %225 = vmatpush.msra.mxu0 0.0
      %226 = vmatpush.msra.mxu0 0.0
      %227 = vmatpush.msra.mxu0 %v202
      %228 = vmatpush.msra.mxu0 %v201
      %229 = vmatmul.f32.gmra.mxu0 %v211
      %v230 = vpop.f32.mrf.mxu0
      %v231 = vadd.f32 %v207, %v230
      %232 = vdwg.mxu0
      %233 = vst [vmem:[%s199] sm:$0xff] %v231
      %p234 = scmp.lt.s32.totalorder %s18, 1
      %s235 = scalar_select %p234, %s18, 1
      %p236 = scmp.lt.s32.totalorder %s19, 0
      %s237 = scalar_select %p236, %s19, 0
      %s238 = sadd.s32 %s237, %s235
      %s239 = smul.addr %s238, 8
      %s240 = scalar_lea.vmem %s3, %s239
      // Predicated region
      $region33: #{patch_merging_forward.1} parent=31 // pred_check
        %p241 = pneg %p116
      $region34: #{patch_merging_forward.1} parent=31 // pred_check_branch
        %243 = sbr.rel (%p241) target = $region36
      $region35: #{patch_merging_forward.1} parent=31 // pred_region
        _
      $region36: #{patch_merging_forward.1} parent=31 // pred_fallthru
        _
    $region32: #{patch_merging_forward.1} parent=5 // pred_fallthru
      _
    %p244 = scmp.le.s32.totalorder 2, %s9
    // Predicated region
    $region37: #{patch_merging_forward.1} parent=5 // pred_check
      %p245 = pneg %p244
    $region38: #{patch_merging_forward.1} parent=5 // pred_check_branch
      %247 = sbr.rel (%p245) target = $region40
    $region39: #{patch_merging_forward.1} parent=5 // pred_region
      %s248 = ssub.s32 %s9, 2
      // Predicated region
      $region41: #{patch_merging_forward.1} parent=39 // pred_check
        %p249 = pneg %p122
      $region42: #{patch_merging_forward.1} parent=39 // pred_check_branch
        %251 = sbr.rel (%p249) target = $region44
      $region43: #{patch_merging_forward.1} parent=39 // pred_region
        %p252 = scmp.lt.s32.totalorder %s20, 1
        %s253 = scalar_select %p252, %s20, 1
        %p254 = scmp.lt.s32.totalorder %s21, 0
        %s255 = scalar_select %p254, %s21, 0
        %s256 = sadd.s32 %s255, %s253
        %s257 = smul.addr %s256, 8
        %s258 = scalar_lea.vmem %s3, %s257
      $region44: #{patch_merging_forward.1} parent=39 // pred_fallthru
        _
    $region40: #{patch_merging_forward.1} parent=5 // pred_fallthru
      _
  $region6: #{patch_merging_forward.1} parent=0 // loop_footer
    %s13 = sadd.s32 1, %s9
  $region7: #{patch_merging_forward.1} parent=0 // loop_footer_branch
    %8 = sbr.rel target = $region3
  $region8: #{patch_merging_forward.1} parent=0 // loop_exit
    _

</llo_original>
